<compile_context>
chip_gen: v7x
topology: tpu7x:2x2x1
jax: 0.10.0
libtpu: 0.0.40
codegen_flags: <defaults>
</compile_context>

<pallas_src>
import jax
import jax.numpy as jnp
from jax.experimental import pallas as pl
from jax.experimental.pallas import tpu as pltpu

LN_EPS = 1e-5          # torch.nn.LayerNorm default
ADAPTER_SCALE = 1.0    # adapter_scalar='1.0' (fixed float, not learnable)


def _adapter_kernel(x_ref, gamma_ref, beta_ref, wd_ref, bd_ref, wu_ref, bu_ref,
                    o_ref):
    x = x_ref[...]                                   # (TM, D) in I/O dtype
    xf = x.astype(jnp.float32)
    residual = xf

    # LayerNorm over the feature dim (adapter_layernorm_option == 'in');
    # statistics in f32 regardless of I/O dtype.
    mean = jnp.mean(xf, axis=-1, keepdims=True)
    var = jnp.mean(jnp.square(xf - mean), axis=-1, keepdims=True)
    xn = (xf - mean) * jax.lax.rsqrt(var + LN_EPS)
    xn = xn * gamma_ref[...].astype(jnp.float32) + beta_ref[...].astype(jnp.float32)

    # down_proj + ReLU  (dropout p=0.0 -> identity).  Matmul operands in the
    # weight dtype (bf16 -> native MXU path), accumulate in f32.
    down = jnp.dot(xn.astype(wd_ref.dtype), wd_ref[...],
                   preferred_element_type=jnp.float32)
    down = jnp.maximum(down + bd_ref[...].astype(jnp.float32), 0.0)

    # up_proj, scale, residual add (in f32), single downcast at the end.
    up = jnp.dot(down.astype(wu_ref.dtype), wu_ref[...],
                 preferred_element_type=jnp.float32)
    up = up + bu_ref[...].astype(jnp.float32)
    up = up * ADAPTER_SCALE

    o_ref[...] = (up + residual).astype(o_ref.dtype)


def _round_up(v, m):
    return -(-v // m) * m


def adapter_forward(x, gamma, beta, w_down, b_down, w_up, b_up, *, tm=1024):
    """x: (B, N, D).  w_down: (D, H), w_up: (H, D) (already transposed vs torch)."""
    B, N, D = x.shape
    H = w_down.shape[1]
    M = B * N

    io_bytes = jnp.dtype(x.dtype).itemsize
    w_bytes = jnp.dtype(w_down.dtype).itemsize

    # ---- lane-dense bottleneck: pad H to a multiple of 128 (numerically exact).
    Hp = _round_up(H, 128)
    if Hp != H:
        w_down = jnp.pad(w_down, ((0, 0), (0, Hp - H)))
        b_down = jnp.pad(b_down, ((0, Hp - H),))
        w_up = jnp.pad(w_up, ((0, Hp - H), (0, 0)))

    # ---- row tile: big enough to amortize grid-step overhead, sized against a
    # conservative VMEM budget so it also fits v7x's 64 MiB VMEM.
    row_mult = 8 if io_bytes >= 4 else 16
    vmem_budget = 40 * 1024 * 1024
    weight_vmem = 2 * ((D * Hp + Hp * D) * w_bytes + (3 * D + Hp) * 4)
    # Double-buffered in/out row tiles plus f32 temporaries (residual/xn/down).
    per_row = 2 * 2 * D * io_bytes + (2 * D + Hp) * 4
    tm_cap = max(row_mult, (vmem_budget - weight_vmem) // per_row)
    tm = min(tm, tm_cap, _round_up(M, row_mult))
    tm = max(row_mult, (tm // row_mult) * row_mult)

    # ---- pad the token axis to a tile multiple; padded rows are sliced off.
    Mp = _round_up(M, tm)
    x2 = x.reshape(M, D)
    if Mp != M:
        x2 = jnp.pad(x2, ((0, Mp - M), (0, 0)))

    gamma2 = gamma.reshape(1, D)
    beta2 = beta.reshape(1, D)
    bd2 = b_down.reshape(1, Hp)
    bu2 = b_up.reshape(1, D)

    cost = pl.CostEstimate(
        flops=4 * Mp * D * Hp + 10 * Mp * D,
        transcendentals=Mp,                              # one rsqrt per row
        bytes_accessed=2 * Mp * D * io_bytes + 2 * D * Hp * w_bytes
        + (3 * D + Hp) * 4,
    )

    out = pl.pallas_call(
        _adapter_kernel,
        out_shape=jax.ShapeDtypeStruct((Mp, D), x.dtype),
        grid=(Mp // tm,),
        in_specs=[
            pl.BlockSpec((tm, D), lambda i: (i, 0)),   # x row tile
            pl.BlockSpec((1, D), lambda i: (0, 0)),    # LN gamma   (resident)
            pl.BlockSpec((1, D), lambda i: (0, 0)),    # LN beta    (resident)
            pl.BlockSpec((D, Hp), lambda i: (0, 0)),   # down_proj weight (D,Hp)
            pl.BlockSpec((1, Hp), lambda i: (0, 0)),   # down_proj bias
            pl.BlockSpec((Hp, D), lambda i: (0, 0)),   # up_proj weight (Hp,D)
            pl.BlockSpec((1, D), lambda i: (0, 0)),    # up_proj bias
        ],
        out_specs=pl.BlockSpec((tm, D), lambda i: (i, 0)),
        compiler_params=pltpu.CompilerParams(
            dimension_semantics=("parallel",),
            vmem_limit_bytes=48 * 1024 * 1024,         # safe on v5e/v6e/v7x
        ),
        cost_estimate=cost,
    )(x2, gamma2, beta2, w_down, bd2, w_up, bu2)

    if Mp != M:
        out = out[:M]
    return out.reshape(B, N, D)


def _reference(x, gamma, beta, w_down, b_down, w_up, b_up):
    xf = x.astype(jnp.float32)
    mean = jnp.mean(xf, axis=-1, keepdims=True)
    var = jnp.mean((xf - mean) ** 2, axis=-1, keepdims=True)
    xn = (xf - mean) * jax.lax.rsqrt(var + LN_EPS) * gamma + beta
    down = jnp.maximum(xn @ w_down + b_down, 0.0)
    up = (down @ w_up + b_up) * ADAPTER_SCALE
    return (up + xf).astype(x.dtype)


if __name__ == "__main__":
    # Small shapes consistent with the module: batch=2, seq=16, d_model=128,
    # bottleneck=32.  (B*N=32 is not a multiple of the default row tile, and
    # H=32 is not a multiple of 128, exercising both padded paths.)
    B, N, D, H = 2, 16, 128, 32

    key = jax.random.PRNGKey(0)
    kx, kwd, kwu, kbd, kbu, kg = jax.random.split(key, 6)

    x = jax.random.normal(kx, (B, N, D), dtype=jnp.float32)

    # The module's 'lora' init zeroes up_proj (adapter becomes a no-op), so use
    # small random values instead so the kernel's hot path is actually exercised.
    w_down = jax.random.normal(kwd, (D, H), dtype=jnp.float32) * 0.05   # (in, out)
    w_up = jax.random.normal(kwu, (H, D), dtype=jnp.float32) * 0.05     # (in, out)
    b_down = jax.random.normal(kbd, (H,), dtype=jnp.float32) * 0.01
    b_up = jax.random.normal(kbu, (D,), dtype=jnp.float32) * 0.01
    gamma = jnp.ones((D,), dtype=jnp.float32) + 0.1 * jax.random.normal(
        kg, (D,), dtype=jnp.float32)
    beta = jnp.zeros((D,), dtype=jnp.float32)

    out = adapter_forward(x, gamma, beta, w_down, b_down, w_up, b_up)
    out = jax.block_until_ready(out)

    ref = _reference(x, gamma, beta, w_down, b_down, w_up, b_up)
    assert out.shape == x.shape
    assert jnp.allclose(out, ref, atol=1e-4, rtol=1e-4), "mismatch vs reference"

    print("KERNEL_OK")
</pallas_src>

<mosaic_0001>
module attributes {stable_mosaic.version = 11 : i64} {
  func.func @_adapter_kernel(%arg0: i32, %arg1: memref<32x128xf32, #tpu.memory_space<vmem>>, %arg2: memref<1x128xf32, #tpu.memory_space<vmem>>, %arg3: memref<1x128xf32, #tpu.memory_space<vmem>>, %arg4: memref<128x128xf32, #tpu.memory_space<vmem>>, %arg5: memref<1x128xf32, #tpu.memory_space<vmem>>, %arg6: memref<128x128xf32, #tpu.memory_space<vmem>>, %arg7: memref<1x128xf32, #tpu.memory_space<vmem>>, %arg8: memref<32x128xf32, #tpu.memory_space<vmem>>) attributes {dimension_semantics = [#tpu.dimension_semantics<parallel>], iteration_bounds = array<i64: 1>, scalar_prefetch = 0 : i64, scratch_operands = 0 : i64, tpu.core_type = #tpu.core_type<tc>, window_params = [{transform_indices = @transform_0, window_bounds = array<i64: 32, 128>}, {pipeline_mode = #tpu.pipeline_mode<synchronous>, transform_indices = @transform_1, window_bounds = array<i64: 1, 128>}, {pipeline_mode = #tpu.pipeline_mode<synchronous>, transform_indices = @transform_2, window_bounds = array<i64: 1, 128>}, {pipeline_mode = #tpu.pipeline_mode<synchronous>, transform_indices = @transform_3, window_bounds = array<i64: 128, 128>}, {pipeline_mode = #tpu.pipeline_mode<synchronous>, transform_indices = @transform_4, window_bounds = array<i64: 1, 128>}, {pipeline_mode = #tpu.pipeline_mode<synchronous>, transform_indices = @transform_5, window_bounds = array<i64: 128, 128>}, {pipeline_mode = #tpu.pipeline_mode<synchronous>, transform_indices = @transform_6, window_bounds = array<i64: 1, 128>}, {transform_indices = @transform_7, window_bounds = array<i64: 32, 128>}]} {
    %c0 = arith.constant 0 : index
    %c0_0 = arith.constant 0 : index
    %0 = vector.load %arg1[%c0, %c0_0] : memref<32x128xf32, #tpu.memory_space<vmem>>, vector<32x128xf32>
    %cst = arith.constant dense<0.000000e+00> : vector<32xf32>
    %1 = vector.multi_reduction <add>, %0, %cst [1] : vector<32x128xf32> to vector<32xf32>
    %2 = vector.shape_cast %1 : vector<32xf32> to vector<32x1xf32>
    %cst_1 = arith.constant 1.280000e+02 : f32
    %3 = vector.broadcast %cst_1 : f32 to vector<32x1xf32>
    %4 = arith.divf %2, %3 : vector<32x1xf32>
    %5 = vector.broadcast %4 : vector<32x1xf32> to vector<32x128xf32>
    %6 = arith.subf %0, %5 : vector<32x128xf32>
    %7 = arith.mulf %6, %6 : vector<32x128xf32>
    %cst_2 = arith.constant dense<0.000000e+00> : vector<32xf32>
    %8 = vector.multi_reduction <add>, %7, %cst_2 [1] : vector<32x128xf32> to vector<32xf32>
    %9 = vector.shape_cast %8 : vector<32xf32> to vector<32x1xf32>
    %cst_3 = arith.constant 1.280000e+02 : f32
    %10 = vector.broadcast %cst_3 : f32 to vector<32x1xf32>
    %11 = arith.divf %9, %10 : vector<32x1xf32>
    %12 = vector.broadcast %4 : vector<32x1xf32> to vector<32x128xf32>
    %13 = arith.subf %0, %12 : vector<32x128xf32>
    %cst_4 = arith.constant 9.99999974E-6 : f32
    %14 = vector.broadcast %cst_4 : f32 to vector<32x1xf32>
    %15 = arith.addf %11, %14 : vector<32x1xf32>
    %16 = math.rsqrt %15 : vector<32x1xf32>
    %17 = vector.broadcast %16 : vector<32x1xf32> to vector<32x128xf32>
    %18 = arith.mulf %13, %17 : vector<32x128xf32>
    %c0_5 = arith.constant 0 : index
    %c0_6 = arith.constant 0 : index
    %19 = vector.load %arg2[%c0_5, %c0_6] : memref<1x128xf32, #tpu.memory_space<vmem>>, vector<1x128xf32>
    %20 = vector.broadcast %19 : vector<1x128xf32> to vector<32x128xf32>
    %21 = arith.mulf %18, %20 : vector<32x128xf32>
    %c0_7 = arith.constant 0 : index
    %c0_8 = arith.constant 0 : index
    %22 = vector.load %arg3[%c0_7, %c0_8] : memref<1x128xf32, #tpu.memory_space<vmem>>, vector<1x128xf32>
    %23 = vector.broadcast %22 : vector<1x128xf32> to vector<32x128xf32>
    %24 = arith.addf %21, %23 : vector<32x128xf32>
    %c0_9 = arith.constant 0 : index
    %c0_10 = arith.constant 0 : index
    %25 = vector.load %arg4[%c0_9, %c0_10] : memref<128x128xf32, #tpu.memory_space<vmem>>, vector<128x128xf32>
    %cst_11 = arith.constant dense<0.000000e+00> : vector<32x128xf32>
    %26 = tpu.matmul %24, %25, %cst_11 {dimension_numbers = #tpu.dot_dimension_numbers<[1], [0], [0], [1], [0, 0, 1, 1], [], []>} : vector<32x128xf32>, vector<128x128xf32>, vector<32x128xf32> -> vector<32x128xf32>
    %c0_12 = arith.constant 0 : index
    %c0_13 = arith.constant 0 : index
    %27 = vector.load %arg5[%c0_12, %c0_13] : memref<1x128xf32, #tpu.memory_space<vmem>>, vector<1x128xf32>
    %28 = vector.broadcast %27 : vector<1x128xf32> to vector<32x128xf32>
    %29 = arith.addf %26, %28 : vector<32x128xf32>
    %cst_14 = arith.constant 0.000000e+00 : f32
    %30 = vector.broadcast %cst_14 : f32 to vector<32x128xf32>
    %31 = arith.maximumf %29, %30 : vector<32x128xf32>
    %c0_15 = arith.constant 0 : index
    %c0_16 = arith.constant 0 : index
    %32 = vector.load %arg6[%c0_15, %c0_16] : memref<128x128xf32, #tpu.memory_space<vmem>>, vector<128x128xf32>
    %cst_17 = arith.constant dense<0.000000e+00> : vector<32x128xf32>
    %33 = tpu.matmul %31, %32, %cst_17 {dimension_numbers = #tpu.dot_dimension_numbers<[1], [0], [0], [1], [0, 0, 1, 1], [], []>} : vector<32x128xf32>, vector<128x128xf32>, vector<32x128xf32> -> vector<32x128xf32>
    %c0_18 = arith.constant 0 : index
    %c0_19 = arith.constant 0 : index
    %34 = vector.load %arg7[%c0_18, %c0_19] : memref<1x128xf32, #tpu.memory_space<vmem>>, vector<1x128xf32>
    %35 = vector.broadcast %34 : vector<1x128xf32> to vector<32x128xf32>
    %36 = arith.addf %33, %35 : vector<32x128xf32>
    %cst_20 = arith.constant 1.000000e+00 : f32
    %37 = vector.broadcast %cst_20 : f32 to vector<32x128xf32>
    %38 = arith.mulf %36, %37 : vector<32x128xf32>
    %39 = arith.addf %38, %0 : vector<32x128xf32>
    %c0_21 = arith.constant 0 : index
    %c0_22 = arith.constant 0 : index
    %40 = vector.load %arg8[%c0_21, %c0_22] : memref<32x128xf32, #tpu.memory_space<vmem>>, vector<32x128xf32>
    tpu.vector_store %arg8[%c0_21, %c0_22], %39 {strides = array<i32>} : memref<32x128xf32, #tpu.memory_space<vmem>>, vector<32x128xf32>,
    return
  }
  func.func @transform_0(%arg0: i32) -> (i32, i32) {
    %c0_i32 = arith.constant 0 : i32
    %c0_i32_0 = arith.constant 0 : i32
    return %arg0, %c0_i32 : i32, i32
  }
  func.func @transform_1(%arg0: i32) -> (i32, i32) {
    %c0_i32 = arith.constant 0 : i32
    %c0_i32_0 = arith.constant 0 : i32
    %c0_i32_1 = arith.constant 0 : i32
    return %c0_i32, %c0_i32_0 : i32, i32
  }
  func.func @transform_2(%arg0: i32) -> (i32, i32) {
    %c0_i32 = arith.constant 0 : i32
    %c0_i32_0 = arith.constant 0 : i32
    %c0_i32_1 = arith.constant 0 : i32
    return %c0_i32, %c0_i32_0 : i32, i32
  }
  func.func @transform_3(%arg0: i32) -> (i32, i32) {
    %c0_i32 = arith.constant 0 : i32
    %c0_i32_0 = arith.constant 0 : i32
    %c0_i32_1 = arith.constant 0 : i32
    return %c0_i32, %c0_i32_0 : i32, i32
  }
  func.func @transform_4(%arg0: i32) -> (i32, i32) {
    %c0_i32 = arith.constant 0 : i32
    %c0_i32_0 = arith.constant 0 : i32
    %c0_i32_1 = arith.constant 0 : i32
    return %c0_i32, %c0_i32_0 : i32, i32
  }
  func.func @transform_5(%arg0: i32) -> (i32, i32) {
    %c0_i32 = arith.constant 0 : i32
    %c0_i32_0 = arith.constant 0 : i32
    %c0_i32_1 = arith.constant 0 : i32
    return %c0_i32, %c0_i32_0 : i32, i32
  }
  func.func @transform_6(%arg0: i32) -> (i32, i32) {
    %c0_i32 = arith.constant 0 : i32
    %c0_i32_0 = arith.constant 0 : i32
    %c0_i32_1 = arith.constant 0 : i32
    return %c0_i32, %c0_i32_0 : i32, i32
  }
  func.func @transform_7(%arg0: i32) -> (i32, i32) {
    %c0_i32 = arith.constant 0 : i32
    %c0_i32_0 = arith.constant 0 : i32
    return %arg0, %c0_i32 : i32, i32
  }
}

</mosaic_0001>

<llo_original>
// kernel: tpu_custom_call.1
$region0: #{tpu_custom_call.1}
  #allocation0 [shape = 'u32[]', space=smem, size = 0x4, offset = 0x4, fixed_abs, tag = 'smem constant byte address 0x4 - core index']
  #allocation1 [shape = 'u32[144,128]{1,0:T(1,128)}', space=vmem, size = 0x12000, scoped, tag = 'internal scratch']
  %s0 = inlined_call_operand.hbm [shape: f32[32,128], index: 0, kind: input, shape index: {}]
  %s1 = inlined_call_operand.vmem [shape: f32[1,128], index: 1, kind: input, shape index: {}]
  %s2 = inlined_call_operand.vmem [shape: f32[1,128], index: 2, kind: input, shape index: {}]
  %s3 = inlined_call_operand.hbm [shape: f32[128,128], index: 3, kind: input, shape index: {}]
  %s4 = inlined_call_operand.vmem [shape: f32[1,128], index: 4, kind: input, shape index: {}]
  %s5 = inlined_call_operand.hbm [shape: f32[128,128], index: 5, kind: input, shape index: {}]
  %s6 = inlined_call_operand.vmem [shape: f32[1,128], index: 6, kind: input, shape index: {}]
  %s7 = inlined_call_operand.hbm [shape: f32[32,128], index: 7, kind: output, shape index: {}]
  %s8 = sld [smem:[#allocation0]]
  $region50: #{tpu_custom_call.1} parent=0
    _
  %s10 = ssub.s32 1, %s8
  %s11 = scalar_select 0, %s10, %s8
  $region1: #{tpu_custom_call.1} parent=0
    #allocation2 [shape = 'u8[16384]{0}', space=vmem, size = 0x4000, scoped, tag = 'input window, operand 0, single buffered']
    #allocation3 [shape = 's32[1]{0}', space=sflag, size = 0x4, scoped, tag = 'scoped memory for tpu_custom_call.1']
    #allocation4 [shape = 's32[1]{0}', space=sflag, size = 0x4, scoped, tag = 'scoped memory for tpu_custom_call.1']
    #allocation5 [shape = 'u8[65536]{0}', space=vmem, size = 0x10000, scoped, tag = 'input window, operand 3, single buffered']
    #allocation6 [shape = 's32[1]{0}', space=sflag, size = 0x4, scoped, tag = 'scoped memory for tpu_custom_call.1']
    #allocation7 [shape = 'u8[65536]{0}', space=vmem, size = 0x10000, scoped, tag = 'input window, operand 5, single buffered']
    #allocation8 [shape = 'u8[16384]{0}', space=vmem, size = 0x4000, scoped, tag = 'output window, operand 0, single buffered']
    %12 = vsyncpa [#allocation3], 0
    %13 = vsyncpa [#allocation6], 0
    %14 = vsyncpa [#allocation4], 0
    // Predicated region
    $region2: #{tpu_custom_call.1} parent=1 // pred_check
      _
    $region3: #{tpu_custom_call.1} parent=1 // pred_check_branch
      %16 = sbr.rel (0) target = $region5
    $region4: #{tpu_custom_call.1} parent=1 // pred_region
      %s18 = ssub.s32 512, 512
      %19 = vsyncadd [#allocation3], %s18
      %s20 = sshll.u32 [#allocation2], 4
      %s21 = int_to_ptr.vmem [resolvable:$true] %s20
      %26 = dma.hbm_to_vmem [thread:$0]  %s0, 512, %s21, [#allocation3], 128, 128, 8
    $region5: #{tpu_custom_call.1} parent=1 // pred_fallthru
      _
    // Predicated region
    $region6: #{tpu_custom_call.1} parent=1 // pred_check
      _
    $region7: #{tpu_custom_call.1} parent=1 // pred_check_branch
      %28 = sbr.rel (0) target = $region9
    $region8: #{tpu_custom_call.1} parent=1 // pred_region
      _
    $region9: #{tpu_custom_call.1} parent=1 // pred_fallthru
      _
    // Predicated region
    $region10: #{tpu_custom_call.1} parent=1 // pred_check
      _
    $region11: #{tpu_custom_call.1} parent=1 // pred_check_branch
      %30 = sbr.rel (0) target = $region13
    $region12: #{tpu_custom_call.1} parent=1 // pred_region
      _
    $region13: #{tpu_custom_call.1} parent=1 // pred_fallthru
      _
    // Predicated region
    $region14: #{tpu_custom_call.1} parent=1 // pred_check
      _
    $region15: #{tpu_custom_call.1} parent=1 // pred_check_branch
      %32 = sbr.rel (0) target = $region17
    $region16: #{tpu_custom_call.1} parent=1 // pred_region
      %s34 = ssub.s32 2048, 2048
      %35 = vsyncadd [#allocation6], %s34
      %s36 = sshll.u32 [#allocation5], 4
      %s37 = int_to_ptr.vmem [resolvable:$true] %s36
      %42 = dma.hbm_to_vmem [thread:$0]  %s3, 2048, %s37, [#allocation6], 128, 128, 8
    $region17: #{tpu_custom_call.1} parent=1 // pred_fallthru
      _
    // Predicated region
    $region18: #{tpu_custom_call.1} parent=1 // pred_check
      _
    $region19: #{tpu_custom_call.1} parent=1 // pred_check_branch
      %44 = sbr.rel (0) target = $region21
    $region20: #{tpu_custom_call.1} parent=1 // pred_region
      _
    $region21: #{tpu_custom_call.1} parent=1 // pred_fallthru
      _
    // Predicated region
    $region22: #{tpu_custom_call.1} parent=1 // pred_check
      _
    $region23: #{tpu_custom_call.1} parent=1 // pred_check_branch
      %46 = sbr.rel (0) target = $region25
    $region24: #{tpu_custom_call.1} parent=1 // pred_region
      %s48 = ssub.s32 2048, 2048
      %49 = vsyncadd [#allocation6], %s48
      %s50 = sshll.u32 [#allocation7], 4
      %s51 = int_to_ptr.vmem [resolvable:$true] %s50
      %56 = dma.hbm_to_vmem [thread:$0]  %s5, 2048, %s51, [#allocation6], 128, 128, 8
    $region25: #{tpu_custom_call.1} parent=1 // pred_fallthru
      _
    // Predicated region
    $region26: #{tpu_custom_call.1} parent=1 // pred_check
      _
    $region27: #{tpu_custom_call.1} parent=1 // pred_check_branch
      %58 = sbr.rel (0) target = $region29
    $region28: #{tpu_custom_call.1} parent=1 // pred_region
      _
    $region29: #{tpu_custom_call.1} parent=1 // pred_fallthru
      _
    // Predicated region
    $region30: #{tpu_custom_call.1} parent=1 // pred_check
      _
    $region31: #{tpu_custom_call.1} parent=1 // pred_check_branch
      %60 = sbr.rel (0) target = $region33
    $region32: #{tpu_custom_call.1} parent=1 // pred_region
      %61 = dma.done [#allocation3], 512
    $region33: #{tpu_custom_call.1} parent=1 // pred_fallthru
      _
    // Predicated region
    $region34: #{tpu_custom_call.1} parent=1 // pred_check
      _
    $region35: #{tpu_custom_call.1} parent=1 // pred_check_branch
      %63 = sbr.rel (0) target = $region37
    $region36: #{tpu_custom_call.1} parent=1 // pred_region
      %64 = dma.done [#allocation6], 2048
    $region37: #{tpu_custom_call.1} parent=1 // pred_fallthru
      _
    // Predicated region
    $region38: #{tpu_custom_call.1} parent=1 // pred_check
      _
    $region39: #{tpu_custom_call.1} parent=1 // pred_check_branch
      %66 = sbr.rel (0) target = $region41
    $region40: #{tpu_custom_call.1} parent=1 // pred_region
      %67 = dma.done [#allocation6], 2048
    $region41: #{tpu_custom_call.1} parent=1 // pred_fallthru
      _
    %v68 = vld [vmem:[#allocation2] sm:$0xff]
    %v69 = vld [vmem:[#allocation2 + $0x8] sm:$0xff]
    %v70 = vld [vmem:[#allocation2 + $0x10] sm:$0xff]
    %v71 = vld [vmem:[#allocation2 + $0x18] sm:$0xff]
    %72 = vadd.xlane.f32.xlu0 %v68
    %v73 = vpop.xlane.xlu0 %72
    %74 = vadd.xlane.f32.xlu0 %v69
    %v75 = vpop.xlane.xlu0 %74
    %76 = vadd.xlane.f32.xlu0 %v70
    %v77 = vpop.xlane.xlu0 %76
    %78 = vadd.xlane.f32.xlu0 %v71
    %v79 = vpop.xlane.xlu0 %78
    %v80 = vrcp.pop 128.0
    %v81 = vmul.f32 %v73, %v80
    %v82 = vmul.f32 %v75, %v80
    %v83 = vmul.f32 %v77, %v80
    %v84 = vmul.f32 %v79, %v80
    %v85 = vsub.f32 %v68, %v81
    %v86 = vsub.f32 %v69, %v82
    %v87 = vsub.f32 %v70, %v83
    %v88 = vsub.f32 %v71, %v84
    %v89 = vmul.f32 %v85, %v85
    %v90 = vmul.f32 %v86, %v86
    %v91 = vmul.f32 %v87, %v87
    %v92 = vmul.f32 %v88, %v88
    %93 = vadd.xlane.f32.xlu0 %v89
    %v94 = vpop.xlane.xlu0 %93
    %95 = vadd.xlane.f32.xlu0 %v90
    %v96 = vpop.xlane.xlu0 %95
    %97 = vadd.xlane.f32.xlu0 %v91
    %v98 = vpop.xlane.xlu0 %97
    %99 = vadd.xlane.f32.xlu0 %v92
    %v100 = vpop.xlane.xlu0 %99
    %v101 = vmul.f32 %v94, %v80
    %v102 = vmul.f32 %v96, %v80
    %v103 = vmul.f32 %v98, %v80
    %v104 = vmul.f32 %v100, %v80
    %v105 = vadd.f32 %v101, 1e-05
    %v106 = vadd.f32 %v102, 1e-05
    %v107 = vadd.f32 %v103, 1e-05
    %v108 = vadd.f32 %v104, 1e-05
    %v109 = vrsqrt.pop %v105
    %v110 = vrsqrt.pop %v106
    %v111 = vrsqrt.pop %v107
    %v112 = vrsqrt.pop %v108
    %v113 = vmul.f32 %v85, %v109
    %v114 = vmul.f32 %v86, %v110
    %v115 = vmul.f32 %v87, %v111
    %v116 = vmul.f32 %v88, %v112
    %v117 = vld [vmem:[%s1] sm:$0x1]
    %v119 = vlaneseq
    %v120 = vshrl.u32 %v119, 7
    %v121 = vsub.s32 0, %v120
    %v122 = vrot.slane %v117, %v121
    %v124 = vmul.f32 %v113, %v122
    %v125 = vmul.f32 %v114, %v122
    %v126 = vmul.f32 %v115, %v122
    %v127 = vmul.f32 %v116, %v122
    %v128 = vld [vmem:[%s2] sm:$0x1]
    %v130 = vlaneseq
    %v131 = vshrl.u32 %v130, 7
    %v132 = vsub.s32 0, %v131
    %v133 = vrot.slane %v128, %v132
    %v135 = vadd.f32 %v124, %v133
    %v136 = vadd.f32 %v125, %v133
    %v137 = vadd.f32 %v126, %v133
    %v138 = vadd.f32 %v127, %v133
    %v139 = vld [vmem:[#allocation5] sm:$0xff]
    %v140 = vld [vmem:[#allocation5 + $0x8] sm:$0xff]
    %v141 = vld [vmem:[#allocation5 + $0x10] sm:$0xff]
    %v142 = vld [vmem:[#allocation5 + $0x18] sm:$0xff]
    %v143 = vld [vmem:[#allocation5 + $0x20] sm:$0xff]
    %v144 = vld [vmem:[#allocation5 + $0x28] sm:$0xff]
    %v145 = vld [vmem:[#allocation5 + $0x30] sm:$0xff]
    %v146 = vld [vmem:[#allocation5 + $0x38] sm:$0xff]
    %v147 = vld [vmem:[#allocation5 + $0x40] sm:$0xff]
    %v148 = vld [vmem:[#allocation5 + $0x48] sm:$0xff]
    %v149 = vld [vmem:[#allocation5 + $0x50] sm:$0xff]
    %v150 = vld [vmem:[#allocation5 + $0x58] sm:$0xff]
    %v151 = vld [vmem:[#allocation5 + $0x60] sm:$0xff]
    %v152 = vld [vmem:[#allocation5 + $0x68] sm:$0xff]
    %v153 = vld [vmem:[#allocation5 + $0x70] sm:$0xff]
    %v154 = vld [vmem:[#allocation5 + $0x78] sm:$0xff]
    %v155 = vld [vmem:[%s4] sm:$0x1]
    %v157 = vlaneseq
    %v158 = vshrl.u32 %v157, 7
    %v159 = vsub.s32 0, %v158
    %v160 = vrot.slane %v155, %v159
    %162 = vmatprep.subr.mxu0 0.0
    %163 = vmatpush1.msra.mxu0 %v139
    %164 = vmatprep.subr.mxu0 0.0
    %165 = vmatpush1.msra.mxu0 %v140
    %166 = vmatprep.subr.mxu0 0.0
    %167 = vmatpush1.msra.mxu0 %v141
    %168 = vmatprep.subr.mxu0 0.0
    %169 = vmatpush1.msra.mxu0 %v142
    %170 = vmatprep.subr.mxu0 0.0
    %171 = vmatpush1.msra.mxu0 %v143
    %172 = vmatprep.subr.mxu0 0.0
    %173 = vmatpush1.msra.mxu0 %v144
    %174 = vmatprep.subr.mxu0 0.0
    %175 = vmatpush1.msra.mxu0 %v145
    %176 = vmatprep.subr.mxu0 0.0
    %177 = vmatpush1.msra.mxu0 %v146
    %178 = vmatprep.subr.mxu0 0.0
    %179 = vmatpush1.msra.mxu0 %v147
    %180 = vmatprep.subr.mxu0 0.0
    %181 = vmatpush1.msra.mxu0 %v148
    %182 = vmatprep.subr.mxu0 0.0
    %183 = vmatpush1.msra.mxu0 %v149
    %184 = vmatprep.subr.mxu0 0.0
    %185 = vmatpush1.msra.mxu0 %v150
    %186 = vmatprep.subr.mxu0 0.0
    %187 = vmatpush1.msra.mxu0 %v151
    %188 = vmatprep.subr.mxu0 0.0
    %189 = vmatpush1.msra.mxu0 %v152
    %190 = vmatprep.subr.mxu0 0.0
    %191 = vmatpush1.msra.mxu0 %v153
    %192 = vmatprep.subr.mxu0 0.0
    %193 = vmatpush1.msra.mxu0 %v154
    %194 = vmatprep.subr.mxu0 0.0
    %195 = vmatpush1.msra.mxu0 0.0
    %196 = vmatprep.subr.mxu0 0.0
    %197 = vmatpush1.msra.mxu0 0.0
    %198 = vmatprep.subr.mxu0 0.0
    %199 = vmatpush1.msra.mxu0 0.0
    %200 = vmatprep.subr.mxu0 0.0
    %201 = vmatpush1.msra.mxu0 0.0
    %202 = vmatprep.subr.mxu0 0.0
    %203 = vmatpush1.msra.mxu0 0.0
    %204 = vmatprep.subr.mxu0 0.0
    %205 = vmatpush1.msra.mxu0 0.0
    %206 = vmatprep.subr.mxu0 0.0
    %207 = vmatpush1.msra.mxu0 0.0
    %208 = vmatprep.subr.mxu0 0.0
    %209 = vmatpush1.msra.mxu0 0.0
    %210 = vmatprep.subr.mxu0 0.0
    %211 = vmatpush1.msra.mxu0 0.0
    %212 = vmatprep.subr.mxu0 0.0
    %213 = vmatpush1.msra.mxu0 0.0
    %214 = vmatprep.subr.mxu0 0.0
    %215 = vmatpush1.msra.mxu0 0.0
    %216 = vmatprep.subr.mxu0 0.0
    %217 = vmatpush1.msra.mxu0 0.0
    %218 = vmatprep.subr.mxu0 0.0
    %219 = vmatpush1.msra.mxu0 0.0
    %220 = vmatprep.subr.mxu0 0.0
    %221 = vmatpush1.msra.mxu0 0.0
    %222 = vmatprep.subr.mxu0 0.0
    %223 = vmatpush1.msra.mxu0 0.0
    %224 = vmatprep.subr.mxu0 0.0
    %225 = vmatpush1.msra.mxu0 0.0
    %226 = vmatprep.mubr.f32.mxu0 0.0
    %227 = vmatmul.mubr.f32.gmra.mrb[0].mxu0 %v135
    %v228 = vpop.f32.mrb[0].mxu0
    %v229 = vadd.f32 %v160, %v228
    %v230 = vpop.f32.mrb[0].mxu0
    %231 = vmatprep.mubr.f32.mxu0 0.0
    %232 = vmatmul.mubr.f32.gmra.mrb[0].mxu0 %v136
    %v233 = vpop.f32.mrb[0].mxu0
    %v234 = vadd.f32 %v160, %v233
    %v235 = vpop.f32.mrb[0].mxu0
    %236 = vmatprep.mubr.f32.mxu0 0.0
    %237 = vmatmul.mubr.f32.gmra.mrb[0].mxu0 %v137
    %v238 = vpop.f32.mrb[0].mxu0
    %v239 = vadd.f32 %v160, %v238
    %v240 = vpop.f32.mrb[0].mxu0
    %241 = vmatprep.mubr.f32.mxu0 0.0
    %242 = vmatmul.mubr.f32.gmra.mrb[0].mxu0 %v138
    %v243 = vpop.f32.mrb[0].mxu0
    %v244 = vadd.f32 %v160, %v243
    %v245 = vpop.f32.mrb[0].mxu0
    %246 = vdwg.mxu0
    %v247 = vmax.f32 %v229, 0.0
    %v248 = vmax.f32 %v234, 0.0
    %v249 = vmax.f32 %v239, 0.0
    %v250 = vmax.f32 %v244, 0.0
    %v251 = vld [vmem:[#allocation7] sm:$0xff]
    %v252 = vld [vmem:[#allocation7 + $0x8] sm:$0xff]
    %v253 = vld [vmem:[#allocation7 + $0x10] sm:$0xff]
    %v254 = vld [vmem:[#allocation7 + $0x18] sm:$0xff]
    %v255 = vld [vmem:[#allocation7 + $0x20] sm:$0xff]
    %v256 = vld [vmem:[#allocation7 + $0x28] sm:$0xff]
    %v257 = vld [vmem:[#allocation7 + $0x30] sm:$0xff]
    %v258 = vld [vmem:[#allocation7 + $0x38] sm:$0xff]
    %v259 = vld [vmem:[#allocation7 + $0x40] sm:$0xff]
    %v260 = vld [vmem:[#allocation7 + $0x48] sm:$0xff]
    %v261 = vld [vmem:[#allocation7 + $0x50] sm:$0xff]
    %v262 = vld [vmem:[#allocation7 + $0x58] sm:$0xff]
    %v263 = vld [vmem:[#allocation7 + $0x60] sm:$0xff]
    %v264 = vld [vmem:[#allocation7 + $0x68] sm:$0xff]
    %v265 = vld [vmem:[#allocation7 + $0x70] sm:$0xff]
    %v266 = vld [vmem:[#allocation7 + $0x78] sm:$0xff]
    %v267 = vld [vmem:[%s6] sm:$0x1]
    %v269 = vlaneseq
    %v270 = vshrl.u32 %v269, 7
    %v271 = vsub.s32 0, %v270
    %v272 = vrot.slane %v267, %v271
    %274 = vmatprep.subr.mxu0 0.0
    %275 = vmatpush1.msra.mxu0 %v251
    %276 = vmatprep.subr.mxu0 0.0
    %277 = vmatpush1.msra.mxu0 %v252
    %278 = vmatprep.subr.mxu0 0.0
    %279 = vmatpush1.msra.mxu0 %v253
    %280 = vmatprep.subr.mxu0 0.0
    %281 = vmatpush1.msra.mxu0 %v254
    %282 = vmatprep.subr.mxu0 0.0
    %283 = vmatpush1.msra.mxu0 %v255
    %284 = vmatprep.subr.mxu0 0.0
    %285 = vmatpush1.msra.mxu0 %v256
    %286 = vmatprep.subr.mxu0 0.0
    %287 = vmatpush1.msra.mxu0 %v257
    %288 = vmatprep.subr.mxu0 0.0
    %289 = vmatpush1.msra.mxu0 %v258
    %290 = vmatprep.subr.mxu0 0.0
    %291 = vmatpush1.msra.mxu0 %v259
    %292 = vmatprep.subr.mxu0 0.0
    %293 = vmatpush1.msra.mxu0 %v260
    %294 = vmatprep.subr.mxu0 0.0
    %295 = vmatpush1.msra.mxu0 %v261
    %296 = vmatprep.subr.mxu0 0.0
    %297 = vmatpush1.msra.mxu0 %v262
    %298 = vmatprep.subr.mxu0 0.0
    %299 = vmatpush1.msra.mxu0 %v263
    %300 = vmatprep.subr.mxu0 0.0
    %301 = vmatpush1.msra.mxu0 %v264
    %302 = vmatprep.subr.mxu0 0.0
    %303 = vmatpush1.msra.mxu0 %v265
    %304 = vmatprep.subr.mxu0 0.0
    %305 = vmatpush1.msra.mxu0 %v266
    %306 = vmatprep.subr.mxu0 0.0
    %307 = vmatpush1.msra.mxu0 0.0
    %308 = vmatprep.subr.mxu0 0.0
    %309 = vmatpush1.msra.mxu0 0.0
    %310 = vmatprep.subr.mxu0 0.0
    %311 = vmatpush1.msra.mxu0 0.0
    %312 = vmatprep.subr.mxu0 0.0
    %313 = vmatpush1.msra.mxu0 0.0
    %314 = vmatprep.subr.mxu0 0.0
    %315 = vmatpush1.msra.mxu0 0.0
    %316 = vmatprep.subr.mxu0 0.0
    %317 = vmatpush1.msra.mxu0 0.0
    %318 = vmatprep.subr.mxu0 0.0
    %319 = vmatpush1.msra.mxu0 0.0
    %320 = vmatprep.subr.mxu0 0.0
    %321 = vmatpush1.msra.mxu0 0.0
    %322 = vmatprep.subr.mxu0 0.0
    %323 = vmatpush1.msra.mxu0 0.0
    %324 = vmatprep.subr.mxu0 0.0
    %325 = vmatpush1.msra.mxu0 0.0
    %326 = vmatprep.subr.mxu0 0.0
    %327 = vmatpush1.msra.mxu0 0.0
    %328 = vmatprep.subr.mxu0 0.0
    %329 = vmatpush1.msra.mxu0 0.0
    %330 = vmatprep.subr.mxu0 0.0
    %331 = vmatpush1.msra.mxu0 0.0
    %332 = vmatprep.subr.mxu0 0.0
    %333 = vmatpush1.msra.mxu0 0.0
    %334 = vmatprep.subr.mxu0 0.0
    %335 = vmatpush1.msra.mxu0 0.0
    %336 = vmatprep.subr.mxu0 0.0
    %337 = vmatpush1.msra.mxu0 0.0
    %338 = vmatprep.mubr.f32.mxu0 0.0
    %339 = vmatmul.mubr.f32.gmra.mrb[0].mxu0 %v247
    %v340 = vpop.f32.mrb[0].mxu0
    %v341 = vadd.f32 %v272, %v340
    %v342 = vpop.f32.mrb[0].mxu0
    %343 = vmatprep.mubr.f32.mxu0 0.0
    %344 = vmatmul.mubr.f32.gmra.mrb[0].mxu0 %v248
    %v345 = vpop.f32.mrb[0].mxu0
    %v346 = vadd.f32 %v272, %v345
    %v347 = vpop.f32.mrb[0].mxu0
    %348 = vmatprep.mubr.f32.mxu0 0.0
    %349 = vmatmul.mubr.f32.gmra.mrb[0].mxu0 %v249
    %v350 = vpop.f32.mrb[0].mxu0
    %v351 = vadd.f32 %v272, %v350
    %v352 = vpop.f32.mrb[0].mxu0
    %353 = vmatprep.mubr.f32.mxu0 0.0
    %354 = vmatmul.mubr.f32.gmra.mrb[0].mxu0 %v250
    %v355 = vpop.f32.mrb[0].mxu0
    %v356 = vadd.f32 %v272, %v355
    %v357 = vpop.f32.mrb[0].mxu0
    %358 = vdwg.mxu0
    %v359 = vadd.f32 %v341, %v68
    %v360 = vadd.f32 %v346, %v69
    %v361 = vadd.f32 %v351, %v70
    %v362 = vadd.f32 %v356, %v71
    %363 = vst [vmem:[#allocation8] sm:$0xff] %v359
    %364 = vst [vmem:[#allocation8 + $0x8] sm:$0xff] %v360
    %365 = vst [vmem:[#allocation8 + $0x10] sm:$0xff] %v361
    %366 = vst [vmem:[#allocation8 + $0x18] sm:$0xff] %v362
    // Predicated region
    $region42: #{tpu_custom_call.1} parent=1 // pred_check
      _
    $region43: #{tpu_custom_call.1} parent=1 // pred_check_branch
      %368 = sbr.rel (0) target = $region45
    $region44: #{tpu_custom_call.1} parent=1 // pred_region
      %s370 = ssub.s32 512, 512
      %371 = vsyncadd [#allocation4], %s370
      %s372 = sshll.u32 [#allocation8], 4
      %s373 = int_to_ptr.vmem [resolvable:$true] %s372
      %378 = dma.vmem_to_hbm [thread:$0]  %s373, 512, %s7, [#allocation4], 128, 128, 8
    $region45: #{tpu_custom_call.1} parent=1 // pred_fallthru
      _
    // Predicated region
    $region46: #{tpu_custom_call.1} parent=1 // pred_check
      _
    $region47: #{tpu_custom_call.1} parent=1 // pred_check_branch
      %380 = sbr.rel (0) target = $region49
    $region48: #{tpu_custom_call.1} parent=1 // pred_region
      %381 = dma.done [#allocation4], 512
    $region49: #{tpu_custom_call.1} parent=1 // pred_fallthru
      _
    %382 = vsyncpa [#allocation3], 1
    %383 = vsyncpa [#allocation6], 1
    %384 = vsyncpa [#allocation4], 1

</llo_original>
